<compile_context>
chip_gen: v5e
topology: v5e:2x2
jax: 0.10.0
libtpu: 0.0.40
codegen_flags: <defaults>
</compile_context>

<pallas_src>
import functools

import jax
import jax.numpy as jnp
from jax import lax
from jax.experimental import pallas as pl
from jax.experimental.pallas import tpu as pltpu


def _cmd_kernel(x_ref, y_ref, o_ref, msum_ref, acc_ref, *,
                n_moments, n_total, chunk, mask_rows):
    """Two-phase streaming CMD kernel for one feature tile.

    Grid: (feature tile i [parallel], phase p [arbitrary], row tile j [arbitrary]).
      phase 0: accumulate per-feature column sums of x and y   -> msum_ref (2, td)
      phase 1: accumulate sums of (x-mx)^k - (y-my)^k, k=2..n  -> acc_ref
               finalize (squared per-feature diffs) on the last row tile.
    The sample axis is streamed in `chunk`-row slices kept in vregs; axis-0
    reductions use a ones-vector MXU contraction.
    """
    phase = pl.program_id(1)
    j = pl.program_id(2)
    nt = pl.num_programs(2)
    tn = x_ref.shape[0]
    td = x_ref.shape[1]
    f32 = jnp.float32
    inv_n = f32(1.0 / n_total)

    n_chunks = tn // chunk
    tail = tn % chunk
    unroll = max(1, min(4, n_chunks))

    def read_chunk(row_start, rows):
        """Load `rows` (static) rows at `row_start`; return chunk + validity mask."""
        xc = x_ref[pl.ds(row_start, rows), :].astype(f32)
        yc = y_ref[pl.ds(row_start, rows), :].astype(f32)
        if not mask_rows:
            return xc, yc, None
        gids = (j * tn + row_start
                + lax.broadcasted_iota(jnp.int32, (rows, 1), 0))
        return xc, yc, gids < n_total

    def colsum(v, rows):
        # Offload the axis-0 add onto the MXU (ones contraction) so the VPU
        # only runs the multiply chain.  Tiny/unaligned tails use the XLU.
        if rows >= 8:
            ones = jnp.ones((1, rows), f32)
            return jnp.dot(ones, v, preferred_element_type=f32)
        return jnp.sum(v, axis=0, keepdims=True)

    # ----------------- phase 0: column sums (for the means) -----------------
    @pl.when(phase == 0)
    def _phase_sums():
        @pl.when(j == 0)
        def _init_sums():
            msum_ref[...] = jnp.zeros_like(msum_ref)

        def sums_of(row_start, rows):
            xc, yc, valid = read_chunk(row_start, rows)
            if valid is not None:
                xc = jnp.where(valid, xc, 0.0)
                yc = jnp.where(valid, yc, 0.0)
            return colsum(xc, rows), colsum(yc, rows)

        def body(c, carry):
            sx_sum, sy_sum = carry
            r = pl.multiple_of(c * chunk, chunk)
            dx, dy = sums_of(r, chunk)
            return sx_sum + dx, sy_sum + dy

        zero = jnp.zeros((1, td), f32)
        if n_chunks:
            sx_sum, sy_sum = lax.fori_loop(0, n_chunks, body, (zero, zero),
                                           unroll=unroll)
        else:
            sx_sum, sy_sum = zero, zero
        if tail:
            dx, dy = sums_of(n_chunks * chunk, tail)
            sx_sum, sy_sum = sx_sum + dx, sy_sum + dy
        msum_ref[0:1, :] += sx_sum
        msum_ref[1:2, :] += sy_sum

    # ------------- phase 1: centered-moment sums + finalize -------------
    @pl.when(phase == 1)
    def _phase_moments():
        @pl.when(j == 0)
        def _init_acc():
            acc_ref[...] = jnp.zeros_like(acc_ref)

        mx = msum_ref[0:1, :] * inv_n      # (1, td) means (cheap recompute)
        my = msum_ref[1:2, :] * inv_n

        if n_moments >= 2:
            def moments_of(row_start, rows):
                xc, yc, valid = read_chunk(row_start, rows)
                sx = xc - mx
                sy = yc - my
                if valid is not None:
                    # padded rows contribute exactly 0 to every centered power
                    sx = jnp.where(valid, sx, 0.0)
                    sy = jnp.where(valid, sy, 0.0)
                px, py = sx, sy
                deltas = []
                for _ in range(n_moments - 1):
                    px = px * sx
                    py = py * sy
                    deltas.append(colsum(px, rows) - colsum(py, rows))
                return tuple(deltas)

            def body(c, carry):
                r = pl.multiple_of(c * chunk, chunk)
                d = moments_of(r, chunk)
                return tuple(a + b for a, b in zip(carry, d))

            init = tuple(jnp.zeros((1, td), f32) for _ in range(n_moments - 1))
            if n_chunks:
                sums = lax.fori_loop(0, n_chunks, body, init, unroll=unroll)
            else:
                sums = init
            if tail:
                d = moments_of(n_chunks * chunk, tail)
                sums = tuple(a + b for a, b in zip(sums, d))
            for m in range(n_moments - 1):
                acc_ref[m + 1:m + 2, :] += sums[m]

        @pl.when(j == nt - 1)
        def _finalize():
            d0 = mx - my
            rows_out = [d0 * d0]
            for m in range(1, n_moments):
                dk = acc_ref[m:m + 1, :] * inv_n
                rows_out.append(dk * dk)
            # one full-width, lane-dense store of the whole output block
            o_ref[0] = jnp.concatenate(rows_out, axis=0)


def _tpu_vmem_capacity_bytes():
    try:
        info = pltpu.get_tpu_info()
        cap = getattr(info, "vmem_capacity_bytes", None)
        if cap:
            return int(cap)
    except Exception:
        pass
    return 64 << 20  # conservative (v7x physical VMEM per TensorCore)


def _pick_feature_tile(d_pad):
    """128-multiple feature tile dividing the (padded) feature dim."""
    td = min(d_pad, 512)
    while d_pad % td:
        td -= 128
    if td == d_pad and d_pad >= 256:
        # v7x has 2 TensorCores: keep >= 2 'parallel' grid programs.
        half = d_pad // 2
        td = half if half % 128 == 0 else 128
    return td


def _pick_row_tile(n, td, itemsize, budget_bytes):
    """Largest 8-multiple row tile whose double-buffered x+y blocks fit the budget."""
    max_rows = budget_bytes // (2 * 2 * td * itemsize)   # 2 operands x 2 buffers
    max_rows = max(8, (max_rows // 8) * 8)
    return n if n <= max_rows else max_rows


def cmd(x, y, n_moments, *, row_tile=None):
    """Pallas TPU equivalent of CMD().forward(x, y, n_moments).

    x, y: [N, D] arrays (samples x features); n_moments: static Python int.
    Returns a scalar (float32).
    """
    assert x.ndim == 2 and y.ndim == 2, "CMD expects [samples, features] inputs"
    assert x.shape == y.shape, "x and y must have the same shape"
    assert n_moments >= 1
    n, d = x.shape

    # Pad features to a lane multiple: padded columns are identical (zero) in
    # x and y so every per-moment difference there is exactly 0.
    d_pad = max(128, ((d + 127) // 128) * 128)
    if d_pad != d:
        x = jnp.pad(x, ((0, 0), (0, d_pad - d)))
        y = jnp.pad(y, ((0, 0), (0, d_pad - d)))

    cap = _tpu_vmem_capacity_bytes()
    budget = max(4 << 20, min(cap // 4, 24 << 20))   # generation-aware input budget

    td = _pick_feature_tile(d_pad)
    nf = d_pad // td
    itemsize = jnp.dtype(x.dtype).itemsize
    tn = row_tile if row_tile is not None else _pick_row_tile(n, td, itemsize, budget)
    tn = max(1, min(int(tn), n))
    nt = pl.cdiv(n, tn)
    mask_rows = (nt * tn != n)

    kernel = functools.partial(_cmd_kernel, n_moments=n_moments, n_total=n,
                               chunk=8, mask_rows=mask_rows)

    cost = pl.CostEstimate(
        flops=2 * n * d_pad * (4 * n_moments + 6),             # two passes over x & y
        transcendentals=0,
        bytes_accessed=2 * (x.nbytes + y.nbytes) + nf * n_moments * td * 4,
    )

    partials = pl.pallas_call(
        kernel,
        out_shape=jax.ShapeDtypeStruct((nf, n_moments, td), jnp.float32),
        grid=(nf, 2, nt),
        in_specs=[
            pl.BlockSpec((tn, td), lambda i, p, j: (j, i)),
            pl.BlockSpec((tn, td), lambda i, p, j: (j, i)),
        ],
        out_specs=pl.BlockSpec((1, n_moments, td), lambda i, p, j: (i, 0, 0)),
        scratch_shapes=[
            pltpu.VMEM((2, td), jnp.float32),            # column sums of x / y
            pltpu.VMEM((n_moments, td), jnp.float32),    # per-moment diff sums
        ],
        compiler_params=pltpu.CompilerParams(
            dimension_semantics=("parallel", "arbitrary", "arbitrary"),
            vmem_limit_bytes=int(min(cap // 2, max(32 << 20, 2 * budget))),
        ),
        cost_estimate=cost,
    )(x, y)

    # Reduce per-tile / per-feature squared diffs -> per-moment squared L2,
    # then sqrt + sum over n_moments scalars (left to XLA; it fuses for free).
    sums = jnp.sum(partials, axis=(0, 2))        # (n_moments,)
    return jnp.sum(jnp.sqrt(sums))


def cmd_ref(x, y, n_moments):
    """Pure-JAX reference mirroring the PyTorch module."""
    mx = jnp.mean(x, axis=0)
    my = jnp.mean(y, axis=0)
    sx = x - mx
    sy = y - my

    def matchnorm(a, b):
        return jnp.sqrt(jnp.sum((a - b) ** 2))

    scms = matchnorm(mx, my)
    for i in range(n_moments - 1):
        k = i + 2
        scms = scms + matchnorm(jnp.mean(sx ** k, axis=0),
                                jnp.mean(sy ** k, axis=0))
    return scms


if __name__ == "__main__":
    n_moments = 5

    # Small shapes implied by CMD's forward: x, y are [samples, hidden].
    kx, ky = jax.random.split(jax.random.PRNGKey(0))
    x = jax.random.normal(kx, (8, 32), jnp.float32)
    y = 0.5 * jax.random.normal(ky, (8, 32), jnp.float32) + 0.1
    out = cmd(x, y, n_moments)
    jax.block_until_ready(out)
    ref = cmd_ref(x, y, n_moments)
    assert jnp.allclose(out, ref, rtol=1e-4, atol=1e-4), (out, ref)

    # 128-aligned feature dim -> two 'parallel' feature tiles (v7x megacore path).
    k1, k2 = jax.random.split(jax.random.PRNGKey(1))
    x2 = jax.random.normal(k1, (16, 256), jnp.float32)
    y2 = 0.8 * jax.random.normal(k2, (16, 256), jnp.float32)
    out2 = cmd(x2, y2, n_moments)
    jax.block_until_ready(out2)
    ref2 = cmd_ref(x2, y2, n_moments)
    assert jnp.allclose(out2, ref2, rtol=1e-4, atol=1e-4), (out2, ref2)

    # Sample-axis tiling + partial-row masking + feature padding path
    # (forced small row tile so the multi-N-tile code is exercised at small N).
    k3, k4 = jax.random.split(jax.random.PRNGKey(2))
    x3 = jax.random.normal(k3, (20, 200), jnp.float32)
    y3 = 0.7 * jax.random.normal(k4, (20, 200), jnp.float32) - 0.2
    out3 = cmd(x3, y3, n_moments, row_tile=8)
    jax.block_until_ready(out3)
    ref3 = cmd_ref(x3, y3, n_moments)
    assert jnp.allclose(out3, ref3, rtol=1e-4, atol=1e-4), (out3, ref3)

    print("KERNEL_OK")
</pallas_src>

<mosaic_0001>
module attributes {stable_mosaic.version = 11 : i64} {
  func.func @_cmd_kernel(%arg0: i32, %arg1: i32, %arg2: i32, %arg3: memref<8x128xf32, #tpu.memory_space<vmem>>, %arg4: memref<8x128xf32, #tpu.memory_space<vmem>>, %arg5: memref<1x5x128xf32, #tpu.memory_space<vmem>>, %arg6: memref<2x128xf32, #tpu.memory_space<vmem>>, %arg7: memref<5x128xf32, #tpu.memory_space<vmem>>) attributes {dimension_semantics = [#tpu.dimension_semantics<parallel>, #tpu.dimension_semantics<arbitrary>, #tpu.dimension_semantics<arbitrary>], iteration_bounds = array<i64: 1, 2, 1>, scalar_prefetch = 0 : i64, scratch_operands = 2 : i64, tpu.core_type = #tpu.core_type<tc>, window_params = [{transform_indices = @transform_0, window_bounds = array<i64: 8, 128>}, {transform_indices = @transform_1, window_bounds = array<i64: 8, 128>}, {transform_indices = @transform_2, window_bounds = array<i64: 1, 5, 128>}]} {
    %c0_i32 = arith.constant 0 : i32
    %0 = arith.cmpi eq, %arg1, %c0_i32 : i32
    %1 = arith.extui %0 : i1 to i32
    %c0_i32_0 = arith.constant 0 : i32
    %2 = arith.cmpi ne, %1, %c0_i32_0 : i32
    scf.if %2 {
      %c0_i32_2 = arith.constant 0 : i32
      %6 = arith.cmpi eq, %arg2, %c0_i32_2 : i32
      %7 = arith.extui %6 : i1 to i32
      %c0_i32_3 = arith.constant 0 : i32
      %8 = arith.cmpi ne, %7, %c0_i32_3 : i32
      scf.if %8 {
        %cst_19 = arith.constant 0.000000e+00 : f32
        %28 = vector.broadcast %cst_19 : f32 to vector<2x128xf32>
        %c0_20 = arith.constant 0 : index
        %c0_21 = arith.constant 0 : index
        %29 = vector.load %arg6[%c0_20, %c0_21] : memref<2x128xf32, #tpu.memory_space<vmem>>, vector<2x128xf32>
        tpu.vector_store %arg6[%c0_20, %c0_21], %28 {strides = array<i32>} : memref<2x128xf32, #tpu.memory_space<vmem>>, vector<2x128xf32>,
      } else {
      }
      %cst_4 = arith.constant 0.000000e+00 : f32
      %9 = vector.broadcast %cst_4 : f32 to vector<1x128xf32>
      %c0_i32_5 = arith.constant 0 : i32
      %c8_i32 = arith.constant 8 : i32
      %10 = arith.muli %c0_i32_5, %c8_i32 : i32
      %11 = tpu.assume_multiple %10, 8 : i32
      %12 = arith.index_cast %11 : i32 to index
      %c0 = arith.constant 0 : index
      %13 = vector.load %arg3[%12, %c0] : memref<8x128xf32, #tpu.memory_space<vmem>>, vector<8x128xf32>
      %14 = arith.index_cast %11 : i32 to index
      %c0_6 = arith.constant 0 : index
      %15 = vector.load %arg4[%14, %c0_6] : memref<8x128xf32, #tpu.memory_space<vmem>>, vector<8x128xf32>
      %cst_7 = arith.constant 1.000000e+00 : f32
      %16 = vector.broadcast %cst_7 : f32 to vector<1x8xf32>
      %cst_8 = arith.constant dense<0.000000e+00> : vector<1x128xf32>
      %17 = tpu.matmul %16, %13, %cst_8 {dimension_numbers = #tpu.dot_dimension_numbers<[1], [0], [0], [1], [0, 0, 1, 1], [], []>} : vector<1x8xf32>, vector<8x128xf32>, vector<1x128xf32> -> vector<1x128xf32>
      %cst_9 = arith.constant 1.000000e+00 : f32
      %18 = vector.broadcast %cst_9 : f32 to vector<1x8xf32>
      %cst_10 = arith.constant dense<0.000000e+00> : vector<1x128xf32>
      %19 = tpu.matmul %18, %15, %cst_10 {dimension_numbers = #tpu.dot_dimension_numbers<[1], [0], [0], [1], [0, 0, 1, 1], [], []>} : vector<1x8xf32>, vector<8x128xf32>, vector<1x128xf32> -> vector<1x128xf32>
      %20 = arith.addf %9, %17 : vector<1x128xf32>
      %21 = arith.addf %9, %19 : vector<1x128xf32>
      %c1_i32_11 = arith.constant 1 : i32
      %c0_12 = arith.constant 0 : index
      %c0_13 = arith.constant 0 : index
      %22 = vector.load %arg6[%c0_12, %c0_13] : memref<2x128xf32, #tpu.memory_space<vmem>>, vector<1x128xf32>
      %23 = arith.addf %22, %20 : vector<1x128xf32>
      %c0_14 = arith.constant 0 : index
      %c0_15 = arith.constant 0 : index
      %24 = vector.load %arg6[%c0_14, %c0_15] : memref<2x128xf32, #tpu.memory_space<vmem>>, vector<1x128xf32>
      tpu.vector_store %arg6[%c0_14, %c0_15], %23 {strides = array<i32>} : memref<2x128xf32, #tpu.memory_space<vmem>>, vector<1x128xf32>,
      %c1 = arith.constant 1 : index
      %c0_16 = arith.constant 0 : index
      %25 = vector.load %arg6[%c1, %c0_16] : memref<2x128xf32, #tpu.memory_space<vmem>>, vector<1x128xf32>
      %26 = arith.addf %25, %21 : vector<1x128xf32>
      %c1_17 = arith.constant 1 : index
      %c0_18 = arith.constant 0 : index
      %27 = vector.load %arg6[%c1_17, %c0_18] : memref<2x128xf32, #tpu.memory_space<vmem>>, vector<1x128xf32>
      tpu.vector_store %arg6[%c1_17, %c0_18], %26 {strides = array<i32>} : memref<2x128xf32, #tpu.memory_space<vmem>>, vector<1x128xf32>,
    } else {
    }
    %c1_i32 = arith.constant 1 : i32
    %3 = arith.cmpi eq, %arg1, %c1_i32 : i32
    %4 = arith.extui %3 : i1 to i32
    %cst = arith.constant 1.250000e-01 : f32
    %c0_i32_1 = arith.constant 0 : i32
    %5 = arith.cmpi ne, %4, %c0_i32_1 : i32
    scf.if %5 {
      %c0_i32_2 = arith.constant 0 : i32
      %6 = arith.cmpi eq, %arg2, %c0_i32_2 : i32
      %7 = arith.extui %6 : i1 to i32
      %c0_i32_3 = arith.constant 0 : i32
      %8 = arith.cmpi ne, %7, %c0_i32_3 : i32
      scf.if %8 {
        %cst_45 = arith.constant 0.000000e+00 : f32
        %76 = vector.broadcast %cst_45 : f32 to vector<5x128xf32>
        %c0_46 = arith.constant 0 : index
        %c0_47 = arith.constant 0 : index
        %77 = vector.load %arg7[%c0_46, %c0_47] : memref<5x128xf32, #tpu.memory_space<vmem>>, vector<5x128xf32>
        tpu.vector_store %arg7[%c0_46, %c0_47], %76 {strides = array<i32>} : memref<5x128xf32, #tpu.memory_space<vmem>>, vector<5x128xf32>,
      } else {
      }
      %c0 = arith.constant 0 : index
      %c0_4 = arith.constant 0 : index
      %9 = vector.load %arg6[%c0, %c0_4] : memref<2x128xf32, #tpu.memory_space<vmem>>, vector<1x128xf32>
      %10 = vector.broadcast %cst : f32 to vector<1x128xf32>
      %11 = arith.mulf %9, %10 : vector<1x128xf32>
      %c1 = arith.constant 1 : index
      %c0_5 = arith.constant 0 : index
      %12 = vector.load %arg6[%c1, %c0_5] : memref<2x128xf32, #tpu.memory_space<vmem>>, vector<1x128xf32>
      %13 = vector.broadcast %cst : f32 to vector<1x128xf32>
      %14 = arith.mulf %12, %13 : vector<1x128xf32>
      %cst_6 = arith.constant 0.000000e+00 : f32
      %15 = vector.broadcast %cst_6 : f32 to vector<1x128xf32>
      %cst_7 = arith.constant 0.000000e+00 : f32
      %16 = vector.broadcast %cst_7 : f32 to vector<1x128xf32>
      %cst_8 = arith.constant 0.000000e+00 : f32
      %17 = vector.broadcast %cst_8 : f32 to vector<1x128xf32>
      %cst_9 = arith.constant 0.000000e+00 : f32
      %18 = vector.broadcast %cst_9 : f32 to vector<1x128xf32>
      %c0_i32_10 = arith.constant 0 : i32
      %c8_i32 = arith.constant 8 : i32
      %19 = arith.muli %c0_i32_10, %c8_i32 : i32
      %20 = tpu.assume_multiple %19, 8 : i32
      %21 = arith.index_cast %20 : i32 to index
      %c0_11 = arith.constant 0 : index
      %22 = vector.load %arg3[%21, %c0_11] : memref<8x128xf32, #tpu.memory_space<vmem>>, vector<8x128xf32>
      %23 = arith.index_cast %20 : i32 to index
      %c0_12 = arith.constant 0 : index
      %24 = vector.load %arg4[%23, %c0_12] : memref<8x128xf32, #tpu.memory_space<vmem>>, vector<8x128xf32>
      %25 = vector.broadcast %11 : vector<1x128xf32> to vector<8x128xf32>
      %26 = arith.subf %22, %25 : vector<8x128xf32>
      %27 = vector.broadcast %14 : vector<1x128xf32> to vector<8x128xf32>
      %28 = arith.subf %24, %27 : vector<8x128xf32>
      %29 = arith.mulf %26, %26 : vector<8x128xf32>
      %30 = arith.mulf %28, %28 : vector<8x128xf32>
      %cst_13 = arith.constant 1.000000e+00 : f32
      %31 = vector.broadcast %cst_13 : f32 to vector<1x8xf32>
      %cst_14 = arith.constant dense<0.000000e+00> : vector<1x128xf32>
      %32 = tpu.matmul %31, %29, %cst_14 {dimension_numbers = #tpu.dot_dimension_numbers<[1], [0], [0], [1], [0, 0, 1, 1], [], []>} : vector<1x8xf32>, vector<8x128xf32>, vector<1x128xf32> -> vector<1x128xf32>
      %cst_15 = arith.constant 1.000000e+00 : f32
      %33 = vector.broadcast %cst_15 : f32 to vector<1x8xf32>
      %cst_16 = arith.constant dense<0.000000e+00> : vector<1x128xf32>
      %34 = tpu.matmul %33, %30, %cst_16 {dimension_numbers = #tpu.dot_dimension_numbers<[1], [0], [0], [1], [0, 0, 1, 1], [], []>} : vector<1x8xf32>, vector<8x128xf32>, vector<1x128xf32> -> vector<1x128xf32>
      %35 = arith.subf %32, %34 : vector<1x128xf32>
      %36 = arith.mulf %29, %26 : vector<8x128xf32>
      %37 = arith.mulf %30, %28 : vector<8x128xf32>
      %cst_17 = arith.constant 1.000000e+00 : f32
      %38 = vector.broadcast %cst_17 : f32 to vector<1x8xf32>
      %cst_18 = arith.constant dense<0.000000e+00> : vector<1x128xf32>
      %39 = tpu.matmul %38, %36, %cst_18 {dimension_numbers = #tpu.dot_dimension_numbers<[1], [0], [0], [1], [0, 0, 1, 1], [], []>} : vector<1x8xf32>, vector<8x128xf32>, vector<1x128xf32> -> vector<1x128xf32>
      %cst_19 = arith.constant 1.000000e+00 : f32
      %40 = vector.broadcast %cst_19 : f32 to vector<1x8xf32>
      %cst_20 = arith.constant dense<0.000000e+00> : vector<1x128xf32>
      %41 = tpu.matmul %40, %37, %cst_20 {dimension_numbers = #tpu.dot_dimension_numbers<[1], [0], [0], [1], [0, 0, 1, 1], [], []>} : vector<1x8xf32>, vector<8x128xf32>, vector<1x128xf32> -> vector<1x128xf32>
      %42 = arith.subf %39, %41 : vector<1x128xf32>
      %43 = arith.mulf %36, %26 : vector<8x128xf32>
      %44 = arith.mulf %37, %28 : vector<8x128xf32>
      %cst_21 = arith.constant 1.000000e+00 : f32
      %45 = vector.broadcast %cst_21 : f32 to vector<1x8xf32>
      %cst_22 = arith.constant dense<0.000000e+00> : vector<1x128xf32>
      %46 = tpu.matmul %45, %43, %cst_22 {dimension_numbers = #tpu.dot_dimension_numbers<[1], [0], [0], [1], [0, 0, 1, 1], [], []>} : vector<1x8xf32>, vector<8x128xf32>, vector<1x128xf32> -> vector<1x128xf32>
      %cst_23 = arith.constant 1.000000e+00 : f32
      %47 = vector.broadcast %cst_23 : f32 to vector<1x8xf32>
      %cst_24 = arith.constant dense<0.000000e+00> : vector<1x128xf32>
      %48 = tpu.matmul %47, %44, %cst_24 {dimension_numbers = #tpu.dot_dimension_numbers<[1], [0], [0], [1], [0, 0, 1, 1], [], []>} : vector<1x8xf32>, vector<8x128xf32>, vector<1x128xf32> -> vector<1x128xf32>
      %49 = arith.subf %46, %48 : vector<1x128xf32>
      %50 = arith.mulf %43, %26 : vector<8x128xf32>
      %51 = arith.mulf %44, %28 : vector<8x128xf32>
      %cst_25 = arith.constant 1.000000e+00 : f32
      %52 = vector.broadcast %cst_25 : f32 to vector<1x8xf32>
      %cst_26 = arith.constant dense<0.000000e+00> : vector<1x128xf32>
      %53 = tpu.matmul %52, %50, %cst_26 {dimension_numbers = #tpu.dot_dimension_numbers<[1], [0], [0], [1], [0, 0, 1, 1], [], []>} : vector<1x8xf32>, vector<8x128xf32>, vector<1x128xf32> -> vector<1x128xf32>
      %cst_27 = arith.constant 1.000000e+00 : f32
      %54 = vector.broadcast %cst_27 : f32 to vector<1x8xf32>
      %cst_28 = arith.constant dense<0.000000e+00> : vector<1x128xf32>
      %55 = tpu.matmul %54, %51, %cst_28 {dimension_numbers = #tpu.dot_dimension_numbers<[1], [0], [0], [1], [0, 0, 1, 1], [], []>} : vector<1x8xf32>, vector<8x128xf32>, vector<1x128xf32> -> vector<1x128xf32>
      %56 = arith.subf %53, %55 : vector<1x128xf32>
      %57 = arith.addf %15, %35 : vector<1x128xf32>
      %58 = arith.addf %16, %42 : vector<1x128xf32>
      %59 = arith.addf %17, %49 : vector<1x128xf32>
      %60 = arith.addf %18, %56 : vector<1x128xf32>
      %c1_i32_29 = arith.constant 1 : i32
      %c1_30 = arith.constant 1 : index
      %c0_31 = arith.constant 0 : index
      %61 = vector.load %arg7[%c1_30, %c0_31] : memref<5x128xf32, #tpu.memory_space<vmem>>, vector<1x128xf32>
      %62 = arith.addf %61, %57 : vector<1x128xf32>
      %c1_32 = arith.constant 1 : index
      %c0_33 = arith.constant 0 : index
      %63 = vector.load %arg7[%c1_32, %c0_33] : memref<5x128xf32, #tpu.memory_space<vmem>>, vector<1x128xf32>
      tpu.vector_store %arg7[%c1_32, %c0_33], %62 {strides = array<i32>} : memref<5x128xf32, #tpu.memory_space<vmem>>, vector<1x128xf32>,
      %c2 = arith.constant 2 : index
      %c0_34 = arith.constant 0 : index
      %64 = vector.load %arg7[%c2, %c0_34] : memref<5x128xf32, #tpu.memory_space<vmem>>, vector<1x128xf32>
      %65 = arith.addf %64, %58 : vector<1x128xf32>
      %c2_35 = arith.constant 2 : index
      %c0_36 = arith.constant 0 : index
      %66 = vector.load %arg7[%c2_35, %c0_36] : memref<5x128xf32, #tpu.memory_space<vmem>>, vector<1x128xf32>
      tpu.vector_store %arg7[%c2_35, %c0_36], %65 {strides = array<i32>} : memref<5x128xf32, #tpu.memory_space<vmem>>, vector<1x128xf32>,
      %c3 = arith.constant 3 : index
      %c0_37 = arith.constant 0 : index
      %67 = vector.load %arg7[%c3, %c0_37] : memref<5x128xf32, #tpu.memory_space<vmem>>, vector<1x128xf32>
      %68 = arith.addf %67, %59 : vector<1x128xf32>
      %c3_38 = arith.constant 3 : index
      %c0_39 = arith.constant 0 : index
      %69 = vector.load %arg7[%c3_38, %c0_39] : memref<5x128xf32, #tpu.memory_space<vmem>>, vector<1x128xf32>
      tpu.vector_store %arg7[%c3_38, %c0_39], %68 {strides = array<i32>} : memref<5x128xf32, #tpu.memory_space<vmem>>, vector<1x128xf32>,
      %c4 = arith.constant 4 : index
      %c0_40 = arith.constant 0 : index
      %70 = vector.load %arg7[%c4, %c0_40] : memref<5x128xf32, #tpu.memory_space<vmem>>, vector<1x128xf32>
      %71 = arith.addf %70, %60 : vector<1x128xf32>
      %c4_41 = arith.constant 4 : index
      %c0_42 = arith.constant 0 : index
      %72 = vector.load %arg7[%c4_41, %c0_42] : memref<5x128xf32, #tpu.memory_space<vmem>>, vector<1x128xf32>
      tpu.vector_store %arg7[%c4_41, %c0_42], %71 {strides = array<i32>} : memref<5x128xf32, #tpu.memory_space<vmem>>, vector<1x128xf32>,
      %c0_i32_43 = arith.constant 0 : i32
      %73 = arith.cmpi eq, %arg2, %c0_i32_43 : i32
      %74 = arith.extui %73 : i1 to i32
      %c0_i32_44 = arith.constant 0 : i32
      %75 = arith.cmpi ne, %74, %c0_i32_44 : i32
      scf.if %75 {
        %76 = arith.subf %11, %14 : vector<1x128xf32>
        %77 = arith.mulf %76, %76 : vector<1x128xf32>
        %c1_45 = arith.constant 1 : index
        %c0_46 = arith.constant 0 : index
        %78 = vector.load %arg7[%c1_45, %c0_46] : memref<5x128xf32, #tpu.memory_space<vmem>>, vector<1x128xf32>
        %79 = vector.broadcast %cst : f32 to vector<1x128xf32>
        %80 = arith.mulf %78, %79 : vector<1x128xf32>
        %81 = arith.mulf %80, %80 : vector<1x128xf32>
        %c2_47 = arith.constant 2 : index
        %c0_48 = arith.constant 0 : index
        %82 = vector.load %arg7[%c2_47, %c0_48] : memref<5x128xf32, #tpu.memory_space<vmem>>, vector<1x128xf32>
        %83 = vector.broadcast %cst : f32 to vector<1x128xf32>
        %84 = arith.mulf %82, %83 : vector<1x128xf32>
        %85 = arith.mulf %84, %84 : vector<1x128xf32>
        %c3_49 = arith.constant 3 : index
        %c0_50 = arith.constant 0 : index
        %86 = vector.load %arg7[%c3_49, %c0_50] : memref<5x128xf32, #tpu.memory_space<vmem>>, vector<1x128xf32>
        %87 = vector.broadcast %cst : f32 to vector<1x128xf32>
        %88 = arith.mulf %86, %87 : vector<1x128xf32>
        %89 = arith.mulf %88, %88 : vector<1x128xf32>
        %c4_51 = arith.constant 4 : index
        %c0_52 = arith.constant 0 : index
        %90 = vector.load %arg7[%c4_51, %c0_52] : memref<5x128xf32, #tpu.memory_space<vmem>>, vector<1x128xf32>
        %91 = vector.broadcast %cst : f32 to vector<1x128xf32>
        %92 = arith.mulf %90, %91 : vector<1x128xf32>
        %93 = arith.mulf %92, %92 : vector<1x128xf32>
        %94 = tpu.concatenate %77, %81, %85, %89, %93 in 0 : vector<1x128xf32>, vector<1x128xf32>, vector<1x128xf32>, vector<1x128xf32>, vector<1x128xf32> -> vector<5x128xf32>
        %c0_53 = arith.constant 0 : index
        %c0_54 = arith.constant 0 : index
        %c0_55 = arith.constant 0 : index
        %95 = vector.load %arg5[%c0_53, %c0_54, %c0_55] : memref<1x5x128xf32, #tpu.memory_space<vmem>>, vector<1x5x128xf32>
        %96 = vector.shape_cast %95 : vector<1x5x128xf32> to vector<5x128xf32>
        %97 = vector.shape_cast %94 : vector<5x128xf32> to vector<1x5x128xf32>
        tpu.vector_store %arg5[%c0_53, %c0_54, %c0_55], %97 {strides = array<i32>} : memref<1x5x128xf32, #tpu.memory_space<vmem>>, vector<1x5x128xf32>,
      } else {
      }
    } else {
    }
    return
  }
  func.func @transform_0(%arg0: i32, %arg1: i32, %arg2: i32) -> (i32, i32) {
    %c0_i32 = arith.constant 0 : i32
    return %arg2, %arg0 : i32, i32
  }
  func.func @transform_1(%arg0: i32, %arg1: i32, %arg2: i32) -> (i32, i32) {
    %c0_i32 = arith.constant 0 : i32
    return %arg2, %arg0 : i32, i32
  }
  func.func @transform_2(%arg0: i32, %arg1: i32, %arg2: i32) -> (i32, i32, i32) {
    %c0_i32 = arith.constant 0 : i32
    %c0_i32_0 = arith.constant 0 : i32
    %c0_i32_1 = arith.constant 0 : i32
    return %arg0, %c0_i32, %c0_i32_0 : i32, i32, i32
  }
}

</mosaic_0001>

<llo_original>
// kernel: tpu_custom_call.1
$region0: #{tpu_custom_call.1}
  #allocation0 [shape = 'u32[]', space=smem, size = 0x4, offset = 0x4, fixed_abs, tag = 'smem constant byte address 0x4 - core index']
  #allocation1 [shape = 'u32[72,128]{1,0:T(1,128)}', space=vmem, size = 0x9000, scoped, tag = 'internal scratch']
  #allocation2 [shape = 'f32[2,128]{1,0:T(2,128)}', space=vmem, size = 0x400, scoped, tag = 'scratch operand']
  #allocation3 [shape = 'f32[5,128]{1,0:T(8,128)}', space=vmem, size = 0x1000, scoped, tag = 'scratch operand']
  %s0 = inlined_call_operand.hbm [shape: f32[8,128], index: 0, kind: input, shape index: {}]
  %s1 = inlined_call_operand.hbm [shape: f32[8,128], index: 1, kind: input, shape index: {}]
  %s2 = inlined_call_operand.vmem [shape: f32[1,5,128], index: 2, kind: output, shape index: {}]
  %s3 = sld [smem:[#allocation0]]
  $region69: #{tpu_custom_call.1} parent=0
    _
  %s5 = ssub.s32 1, %s3
  %s6 = scalar_select 0, %s5, %s3
  $region1: #{tpu_custom_call.1} parent=0
    #allocation4 [shape = 'u8[4096]{0}', space=vmem, size = 0x1000, scoped, tag = 'input window, operand 0, single buffered']
    #allocation5 [shape = 's32[2]{0}', space=sflag, size = 0x8, scoped, tag = 'scoped memory for tpu_custom_call.1']
    #allocation6 [shape = 'u8[4096]{0}', space=vmem, size = 0x1000, scoped, tag = 'input window, operand 1, single buffered']
    #allocation7 [shape = 's32[1]{0}', space=sflag, size = 0x4, scoped, tag = 'scoped memory for tpu_custom_call.1']
    %7 = vsyncpa [#allocation5], 0
    %8 = vsyncpa [#allocation7], 0
    loop: start=0, step=1, limit=4
    $region2: #{tpu_custom_call.1} parent=1 // loop_pre_header
      _
    $region3: #{tpu_custom_call.1} parent=1 // loop_header
      %s10 = sphi 0, %s14
      %p11 = scmp.ge.s32.totalorder %s10, 4
      %s17 = sphi 0, %s36
      %s18 = sphi 0, %s32
      %s19 = sphi 0, %s28
      %s20 = sphi 0, %s17
      %s21 = sphi 0, %s18
      %s22 = sphi 0, %s19
      %s23 = sphi 0, %s20
      %s24 = sphi 0, %s21
      %s25 = sphi 0, %s22
      %s41 = sphi 0, %s43
      %s44 = sphi 0, %s41
      %s45 = sphi 0, %s44
      %s61 = sphi 0, %s45
      %s69 = sphi 0, %s71
      %s72 = sphi 0, %s69
      %s73 = sphi 0, %s72
      %s89 = sphi 0, %s73
      %s95 = sphi 0, %s97
      %s98 = sphi 0, %s95
      %s99 = sphi 0, %s98
      %s115 = sphi 0, %s99
    $region4: #{tpu_custom_call.1} parent=1 // loop_header_branch
      %13 = sbr.rel (%p11) target = $region8
    $region5: #{tpu_custom_call.1} parent=1 // loop_body
      %s15 = ssub.s32 %s10, 1
      %s16 = ssub.s32 %s10, 2
      %s26 = sadd.s32 1, %s19
      %p27 = scmp.ge.s32.totalorder %s26, 1
      %s28 = scalar_select %p27, 0, %s26
      %s29 = sadd.s32 1, %s18
      %s30 = scalar_select %p27, %s29, %s18
      %p31 = scmp.ge.s32.totalorder %s30, 2
      %s32 = scalar_select %p31, 0, %s30
      %s33 = sadd.s32 1, %s17
      %s34 = scalar_select %p31, %s33, %s17
      %p35 = scmp.ge.s32.totalorder %s34, 1
      %s36 = scalar_select %p35, 0, %s34
      %s37 = ssub.s32 %s19, %s28
      %s38 = ssub.s32 %s17, %s36
      %s39 = sor.u32 %s37, %s38
      %p40 = scmp.eq.s32.totalorder %s39, 0
      %s42 = sadd.s32 %s41, 1
      %s43 = scalar_select %p40, %s41, %s42
      %p46 = pneg %p40
      %p47 = scmp.eq.s32.totalorder %s10, 1
      %p48 = por %p46, %p47
      %p49 = scmp.ne.s32.totalorder %s41, %s44
      %p50 = scmp.eq.s32.totalorder %s10, 0
      %p51 = por %p49, %p50
      %p52 = scmp.ne.s32.totalorder %s41, %s44
      %p53 = scmp.eq.s32.totalorder %s15, 1
      %p54 = por %p52, %p53
      %p55 = scmp.ne.s32.totalorder %s44, %s45
      %p56 = scmp.eq.s32.totalorder %s15, 0
      %p57 = por %p55, %p56
      %p58 = scmp.ne.s32.totalorder %s44, %s45
      %p59 = scmp.eq.s32.totalorder %s16, 1
      %p60 = por %p58, %p59
      %p62 = scmp.ne.s32.totalorder %s45, %s61
      %p63 = scmp.eq.s32.totalorder %s16, 0
      %p64 = por %p62, %p63
      %s65 = ssub.s32 %s19, %s28
      %s66 = ssub.s32 %s17, %s36
      %s67 = sor.u32 %s65, %s66
      %p68 = scmp.eq.s32.totalorder %s67, 0
      %s70 = sadd.s32 %s69, 1
      %s71 = scalar_select %p68, %s69, %s70
      %p74 = pneg %p68
      %p75 = scmp.eq.s32.totalorder %s10, 1
      %p76 = por %p74, %p75
      %p77 = scmp.ne.s32.totalorder %s69, %s72
      %p78 = scmp.eq.s32.totalorder %s10, 0
      %p79 = por %p77, %p78
      %p80 = scmp.ne.s32.totalorder %s69, %s72
      %p81 = scmp.eq.s32.totalorder %s15, 1
      %p82 = por %p80, %p81
      %p83 = scmp.ne.s32.totalorder %s72, %s73
      %p84 = scmp.eq.s32.totalorder %s15, 0
      %p85 = por %p83, %p84
      %p86 = scmp.ne.s32.totalorder %s72, %s73
      %p87 = scmp.eq.s32.totalorder %s16, 1
      %p88 = por %p86, %p87
      %p90 = scmp.ne.s32.totalorder %s73, %s89
      %p91 = scmp.eq.s32.totalorder %s16, 0
      %p92 = por %p90, %p91
      %s93 = ssub.s32 %s17, %s36
      %p94 = scmp.eq.s32.totalorder %s93, 0
      %s96 = sadd.s32 %s95, 1
      %s97 = scalar_select %p94, %s95, %s96
      %p100 = pneg %p94
      %p101 = scmp.eq.s32.totalorder %s10, 1
      %p102 = por %p100, %p101
      %p103 = scmp.ne.s32.totalorder %s95, %s98
      %p104 = scmp.eq.s32.totalorder %s10, 0
      %p105 = por %p103, %p104
      %p106 = scmp.ne.s32.totalorder %s95, %s98
      %p107 = scmp.eq.s32.totalorder %s15, 1
      %p108 = por %p106, %p107
      %p109 = scmp.ne.s32.totalorder %s98, %s99
      %p110 = scmp.eq.s32.totalorder %s15, 0
      %p111 = por %p109, %p110
      %p112 = scmp.ne.s32.totalorder %s98, %s99
      %p113 = scmp.eq.s32.totalorder %s16, 1
      %p114 = por %p112, %p113
      %p116 = scmp.ne.s32.totalorder %s99, %s115
      %p117 = scmp.eq.s32.totalorder %s16, 0
      %p118 = por %p116, %p117
      %p119 = scmp.le.s32.totalorder 1, %s10
      %p120 = scmp.lt.s32.totalorder %s10, 3
      %p121 = pnand %p119, %p120
      %p122 = pneg %p121
      // Predicated region
      $region9: #{tpu_custom_call.1} parent=5 // pred_check
        _
      $region10: #{tpu_custom_call.1} parent=5 // pred_check_branch
        %124 = sbr.rel (%p121) target = $region12
      $region11: #{tpu_custom_call.1} parent=5 // pred_region
        %s125 = ssub.s32 %s10, 1
        // Predicated region
        $region13: #{tpu_custom_call.1} parent=11 // pred_check
          %p126 = pneg %p57
        $region14: #{tpu_custom_call.1} parent=11 // pred_check_branch
          %128 = sbr.rel (%p126) target = $region16
        $region15: #{tpu_custom_call.1} parent=11 // pred_region
          %130 = vsyncadd [#allocation5], 0
          %s131 = sadd.s32 %s20, %s22
          %s132 = smul.addr %s131, 8
          %s133 = scalar_lea.hbm %s0, %s132
          %s135 = sshll.u32 %s133, 4
          %s136 = int_to_ptr.hbm [resolvable:$true] %s135
          %s137 = sshll.u32 [#allocation4], 4
          %s138 = int_to_ptr.vmem [resolvable:$true] %s137
          %140 = dma.hbm_to_vmem [thread:$0]  %s136, 128, %s138, [#allocation5]
        $region16: #{tpu_custom_call.1} parent=11 // pred_fallthru
          _
        // Predicated region
        $region17: #{tpu_custom_call.1} parent=11 // pred_check
          %p141 = pneg %p85
        $region18: #{tpu_custom_call.1} parent=11 // pred_check_branch
          %143 = sbr.rel (%p141) target = $region20
        $region19: #{tpu_custom_call.1} parent=11 // pred_region
          %145 = vsyncadd [#allocation7], 0
          %s146 = sadd.s32 %s20, %s22
          %s147 = smul.addr %s146, 8
          %s148 = scalar_lea.hbm %s1, %s147
          %s150 = sshll.u32 %s148, 4
          %s151 = int_to_ptr.hbm [resolvable:$true] %s150
          %s152 = sshll.u32 [#allocation6], 4
          %s153 = int_to_ptr.vmem [resolvable:$true] %s152
          %155 = dma.hbm_to_vmem [thread:$0]  %s151, 128, %s153, [#allocation7]
        $region20: #{tpu_custom_call.1} parent=11 // pred_fallthru
          _
      $region12: #{tpu_custom_call.1} parent=5 // pred_fallthru
        _
      %p156 = scmp.lt.s32.totalorder %s10, 2
      // Predicated region
      $region21: #{tpu_custom_call.1} parent=5 // pred_check
        %p157 = pneg %p156
      $region22: #{tpu_custom_call.1} parent=5 // pred_check_branch
        %159 = sbr.rel (%p157) target = $region24
      $region23: #{tpu_custom_call.1} parent=5 // pred_region
        _
      $region24: #{tpu_custom_call.1} parent=5 // pred_fallthru
        _
      %p160 = scmp.le.s32.totalorder 1, %s10
      %p161 = scmp.lt.s32.totalorder %s10, 3
      %p162 = pnand %p160, %p161
      %p163 = pneg %p162
      // Predicated region
      $region25: #{tpu_custom_call.1} parent=5 // pred_check
        _
      $region26: #{tpu_custom_call.1} parent=5 // pred_check_branch
        %165 = sbr.rel (%p162) target = $region28
      $region27: #{tpu_custom_call.1} parent=5 // pred_region
        %s166 = ssub.s32 %s10, 1
        // Predicated region
        $region29: #{tpu_custom_call.1} parent=27 // pred_check
          %p167 = pneg %p57
        $region30: #{tpu_custom_call.1} parent=27 // pred_check_branch
          %169 = sbr.rel (%p167) target = $region32
        $region31: #{tpu_custom_call.1} parent=27 // pred_region
          %171 = dma.done [#allocation5], 128
        $region32: #{tpu_custom_call.1} parent=27 // pred_fallthru
          _
        // Predicated region
        $region33: #{tpu_custom_call.1} parent=27 // pred_check
          %p172 = pneg %p85
        $region34: #{tpu_custom_call.1} parent=27 // pred_check_branch
          %174 = sbr.rel (%p172) target = $region36
        $region35: #{tpu_custom_call.1} parent=27 // pred_region
          %176 = dma.done [#allocation7], 128
        $region36: #{tpu_custom_call.1} parent=27 // pred_fallthru
          _
        %p177 = pneg %p57
        %p178 = pneg %p54
        %p179 = pneg %p85
        %p180 = pneg %p82
        %p181 = pneg %p111
        %p182 = pneg %p108
        %p183 = scmp.lt.s32.totalorder %s20, 0
        %s184 = scalar_select %p183, %s20, 0
        %s185 = smul.addr %s184, 8
        %s186 = scalar_lea.vmem %s2, %s185
        %p187 = scmp.lt.s32.totalorder %s20, 0
        %s188 = scalar_select %p187, %s20, 0
        %s189 = smul.addr %s188, 8
        %s190 = scalar_lea.vmem %s2, %s189
        %p191 = scmp.eq.s32.totalorder %s21, 0
        // Predicated region
        $region37: #{tpu_custom_call.1} parent=27 // pred_check
          %p192 = pneg %p191
        $region38: #{tpu_custom_call.1} parent=27 // pred_check_branch
          %194 = sbr.rel (%p192) target = $region40
        $region39: #{tpu_custom_call.1} parent=27 // pred_region
          %p195 = scmp.eq.s32.totalorder %s22, 0
          // Predicated region
          $region41: #{tpu_custom_call.1} parent=39 // pred_check
            %p196 = pneg %p195
          $region42: #{tpu_custom_call.1} parent=39 // pred_check_branch
            %198 = sbr.rel (%p196) target = $region44
          $region43: #{tpu_custom_call.1} parent=39 // pred_region
            %199 = vst [vmem:[#allocation2] sm:$0x3] 0.0
          $region44: #{tpu_custom_call.1} parent=39 // pred_fallthru
            _
          %v200 = vld [vmem:[#allocation4] sm:$0xff]
          %v201 = vld [vmem:[#allocation6] sm:$0xff]
          %vm202 = vcmask 64512
          %v204 = vsel %vm202, 1.0, 0
          %206 = vmatpush.msra.mxu0 0.0
          %207 = vmatpush.msra.mxu0 0.0
          %208 = vmatpush.msra.mxu0 0.0
          %209 = vmatpush.msra.mxu0 0.0
          %210 = vmatpush.msra.mxu0 0.0
          %211 = vmatpush.msra.mxu0 0.0
          %212 = vmatpush.msra.mxu0 0.0
          %213 = vmatpush.msra.mxu0 0.0
          %214 = vmatpush.msra.mxu0 0.0
          %215 = vmatpush.msra.mxu0 0.0
          %216 = vmatpush.msra.mxu0 0.0
          %217 = vmatpush.msra.mxu0 0.0
          %218 = vmatpush.msra.mxu0 0.0
          %219 = vmatpush.msra.mxu0 0.0
          %220 = vmatpush.msra.mxu0 0.0
          %221 = vmatpush.msra.mxu0 %v200
          %222 = vmatmul.f32.gmra.mxu0 %v204
          %v223 = vpop.f32.mrf.mxu0
          %v224 = vadd.f32 0.0, %v223
          %225 = vdwg.mxu0
          %226 = vmatpush.msra.mxu0 0.0
          %227 = vmatpush.msra.mxu0 0.0
          %228 = vmatpush.msra.mxu0 0.0
          %229 = vmatpush.msra.mxu0 0.0
          %230 = vmatpush.msra.mxu0 0.0
          %231 = vmatpush.msra.mxu0 0.0
          %232 = vmatpush.msra.mxu0 0.0
          %233 = vmatpush.msra.mxu0 0.0
          %234 = vmatpush.msra.mxu0 0.0
          %235 = vmatpush.msra.mxu0 0.0
          %236 = vmatpush.msra.mxu0 0.0
          %237 = vmatpush.msra.mxu0 0.0
          %238 = vmatpush.msra.mxu0 0.0
          %239 = vmatpush.msra.mxu0 0.0
          %240 = vmatpush.msra.mxu0 0.0
          %241 = vmatpush.msra.mxu0 %v201
          %242 = vmatmul.f32.gmra.mxu0 %v204
          %v243 = vpop.f32.mrf.mxu0
          %v244 = vadd.f32 0.0, %v243
          %245 = vdwg.mxu0
          %v246 = vld [vmem:[#allocation2] sm:$0x1]
          %v247 = vadd.f32 %v246, %v224
          %248 = vst [vmem:[#allocation2] sm:$0x1] %v247
          %v249 = vld [vmem:[#allocation2 + $0x1] sm:$0x1]
          %v250 = vadd.f32 %v249, %v244
          %251 = vst [vmem:[#allocation2 + $0x1] sm:$0x1] %v250
        $region40: #{tpu_custom_call.1} parent=27 // pred_fallthru
          _
        %p252 = scmp.eq.s32.totalorder %s21, 1
        // Predicated region
        $region45: #{tpu_custom_call.1} parent=27 // pred_check
          %p253 = pneg %p252
        $region46: #{tpu_custom_call.1} parent=27 // pred_check_branch
          %255 = sbr.rel (%p253) target = $region48
        $region47: #{tpu_custom_call.1} parent=27 // pred_region
          %p256 = scmp.eq.s32.totalorder %s22, 0
          // Predicated region
          $region49: #{tpu_custom_call.1} parent=47 // pred_check
            %p257 = pneg %p256
          $region50: #{tpu_custom_call.1} parent=47 // pred_check_branch
            %259 = sbr.rel (%p257) target = $region52
          $region51: #{tpu_custom_call.1} parent=47 // pred_region
            %260 = vst [vmem:[#allocation3] sm:$0x1f] 0.0
          $region52: #{tpu_custom_call.1} parent=47 // pred_fallthru
            _
          %v261 = vld [vmem:[#allocation2] sm:$0x1]
          %v262 = vmul.f32 %v261, 0.125
          %v263 = vld [vmem:[#allocation2 + $0x1] sm:$0x1]
          %v264 = vmul.f32 %v263, 0.125
          %v265 = vld [vmem:[#allocation4] sm:$0xff]
          %v266 = vld [vmem:[#allocation6] sm:$0xff]
          %v267 = vperm.slane %v262, 0
          %v268 = vsub.f32 %v265, %v267
          %v269 = vperm.slane %v264, 0
          %v270 = vsub.f32 %v266, %v269
          %v271 = vmul.f32 %v268, %v268
          %v272 = vmul.f32 %v270, %v270
          %vm273 = vcmask 64512
          %v275 = vsel %vm273, 1.0, 0
          %277 = vmatpush.msra.mxu0 0.0
          %278 = vmatpush.msra.mxu0 0.0
          %279 = vmatpush.msra.mxu0 0.0
          %280 = vmatpush.msra.mxu0 0.0
          %281 = vmatpush.msra.mxu0 0.0
          %282 = vmatpush.msra.mxu0 0.0
          %283 = vmatpush.msra.mxu0 0.0
          %284 = vmatpush.msra.mxu0 0.0
          %285 = vmatpush.msra.mxu0 0.0
          %286 = vmatpush.msra.mxu0 0.0
          %287 = vmatpush.msra.mxu0 0.0
          %288 = vmatpush.msra.mxu0 0.0
          %289 = vmatpush.msra.mxu0 0.0
          %290 = vmatpush.msra.mxu0 0.0
          %291 = vmatpush.msra.mxu0 0.0
          %292 = vmatpush.msra.mxu0 %v271
          %293 = vmatmul.f32.gmra.mxu0 %v275
          %v294 = vpop.f32.mrf.mxu0
          %v295 = vadd.f32 0.0, %v294
          %296 = vdwg.mxu0
          %297 = vmatpush.msra.mxu0 0.0
          %298 = vmatpush.msra.mxu0 0.0
          %299 = vmatpush.msra.mxu0 0.0
          %300 = vmatpush.msra.mxu0 0.0
          %301 = vmatpush.msra.mxu0 0.0
          %302 = vmatpush.msra.mxu0 0.0
          %303 = vmatpush.msra.mxu0 0.0
          %304 = vmatpush.msra.mxu0 0.0
          %305 = vmatpush.msra.mxu0 0.0
          %306 = vmatpush.msra.mxu0 0.0
          %307 = vmatpush.msra.mxu0 0.0
          %308 = vmatpush.msra.mxu0 0.0
          %309 = vmatpush.msra.mxu0 0.0
          %310 = vmatpush.msra.mxu0 0.0
          %311 = vmatpush.msra.mxu0 0.0
          %312 = vmatpush.msra.mxu0 %v272
          %313 = vmatmul.f32.gmra.mxu0 %v275
          %v314 = vpop.f32.mrf.mxu0
          %v315 = vadd.f32 0.0, %v314
          %316 = vdwg.mxu0
          %v317 = vsub.f32 %v295, %v315
          %v318 = vmul.f32 %v271, %v268
          %v319 = vmul.f32 %v272, %v270
          %320 = vmatpush.msra.mxu0 0.0
          %321 = vmatpush.msra.mxu0 0.0
          %322 = vmatpush.msra.mxu0 0.0
          %323 = vmatpush.msra.mxu0 0.0
          %324 = vmatpush.msra.mxu0 0.0
          %325 = vmatpush.msra.mxu0 0.0
          %326 = vmatpush.msra.mxu0 0.0
          %327 = vmatpush.msra.mxu0 0.0
          %328 = vmatpush.msra.mxu0 0.0
          %329 = vmatpush.msra.mxu0 0.0
          %330 = vmatpush.msra.mxu0 0.0
          %331 = vmatpush.msra.mxu0 0.0
          %332 = vmatpush.msra.mxu0 0.0
          %333 = vmatpush.msra.mxu0 0.0
          %334 = vmatpush.msra.mxu0 0.0
          %335 = vmatpush.msra.mxu0 %v318
          %336 = vmatmul.f32.gmra.mxu0 %v275
          %v337 = vpop.f32.mrf.mxu0
          %v338 = vadd.f32 0.0, %v337
          %339 = vdwg.mxu0
          %340 = vmatpush.msra.mxu0 0.0
          %341 = vmatpush.msra.mxu0 0.0
          %342 = vmatpush.msra.mxu0 0.0
          %343 = vmatpush.msra.mxu0 0.0
          %344 = vmatpush.msra.mxu0 0.0
          %345 = vmatpush.msra.mxu0 0.0
          %346 = vmatpush.msra.mxu0 0.0
          %347 = vmatpush.msra.mxu0 0.0
          %348 = vmatpush.msra.mxu0 0.0
          %349 = vmatpush.msra.mxu0 0.0
          %350 = vmatpush.msra.mxu0 0.0
          %351 = vmatpush.msra.mxu0 0.0
          %352 = vmatpush.msra.mxu0 0.0
          %353 = vmatpush.msra.mxu0 0.0
          %354 = vmatpush.msra.mxu0 0.0
          %355 = vmatpush.msra.mxu0 %v319
          %356 = vmatmul.f32.gmra.mxu0 %v275
          %v357 = vpop.f32.mrf.mxu0
          %v358 = vadd.f32 0.0, %v357
          %359 = vdwg.mxu0
          %v360 = vsub.f32 %v338, %v358
          %v361 = vmul.f32 %v318, %v268
          %v362 = vmul.f32 %v319, %v270
          %363 = vmatpush.msra.mxu0 0.0
          %364 = vmatpush.msra.mxu0 0.0
          %365 = vmatpush.msra.mxu0 0.0
          %366 = vmatpush.msra.mxu0 0.0
          %367 = vmatpush.msra.mxu0 0.0
          %368 = vmatpush.msra.mxu0 0.0
          %369 = vmatpush.msra.mxu0 0.0
          %370 = vmatpush.msra.mxu0 0.0
          %371 = vmatpush.msra.mxu0 0.0
          %372 = vmatpush.msra.mxu0 0.0
          %373 = vmatpush.msra.mxu0 0.0
          %374 = vmatpush.msra.mxu0 0.0
          %375 = vmatpush.msra.mxu0 0.0
          %376 = vmatpush.msra.mxu0 0.0
          %377 = vmatpush.msra.mxu0 0.0
          %378 = vmatpush.msra.mxu0 %v361
          %379 = vmatmul.f32.gmra.mxu0 %v275
          %v380 = vpop.f32.mrf.mxu0
          %v381 = vadd.f32 0.0, %v380
          %382 = vdwg.mxu0
          %383 = vmatpush.msra.mxu0 0.0
          %384 = vmatpush.msra.mxu0 0.0
          %385 = vmatpush.msra.mxu0 0.0
          %386 = vmatpush.msra.mxu0 0.0
          %387 = vmatpush.msra.mxu0 0.0
          %388 = vmatpush.msra.mxu0 0.0
          %389 = vmatpush.msra.mxu0 0.0
          %390 = vmatpush.msra.mxu0 0.0
          %391 = vmatpush.msra.mxu0 0.0
          %392 = vmatpush.msra.mxu0 0.0
          %393 = vmatpush.msra.mxu0 0.0
          %394 = vmatpush.msra.mxu0 0.0
          %395 = vmatpush.msra.mxu0 0.0
          %396 = vmatpush.msra.mxu0 0.0
          %397 = vmatpush.msra.mxu0 0.0
          %398 = vmatpush.msra.mxu0 %v362
          %399 = vmatmul.f32.gmra.mxu0 %v275
          %v400 = vpop.f32.mrf.mxu0
          %v401 = vadd.f32 0.0, %v400
          %402 = vdwg.mxu0
          %v403 = vsub.f32 %v381, %v401
          %v404 = vmul.f32 %v361, %v268
          %v405 = vmul.f32 %v362, %v270
          %406 = vmatpush.msra.mxu0 0.0
          %407 = vmatpush.msra.mxu0 0.0
          %408 = vmatpush.msra.mxu0 0.0
          %409 = vmatpush.msra.mxu0 0.0
          %410 = vmatpush.msra.mxu0 0.0
          %411 = vmatpush.msra.mxu0 0.0
          %412 = vmatpush.msra.mxu0 0.0
          %413 = vmatpush.msra.mxu0 0.0
          %414 = vmatpush.msra.mxu0 0.0
          %415 = vmatpush.msra.mxu0 0.0
          %416 = vmatpush.msra.mxu0 0.0
          %417 = vmatpush.msra.mxu0 0.0
          %418 = vmatpush.msra.mxu0 0.0
          %419 = vmatpush.msra.mxu0 0.0
          %420 = vmatpush.msra.mxu0 0.0
          %421 = vmatpush.msra.mxu0 %v404
          %422 = vmatmul.f32.gmra.mxu0 %v275
          %v423 = vpop.f32.mrf.mxu0
          %v424 = vadd.f32 0.0, %v423
          %425 = vdwg.mxu0
          %426 = vmatpush.msra.mxu0 0.0
          %427 = vmatpush.msra.mxu0 0.0
          %428 = vmatpush.msra.mxu0 0.0
          %429 = vmatpush.msra.mxu0 0.0
          %430 = vmatpush.msra.mxu0 0.0
          %431 = vmatpush.msra.mxu0 0.0
          %432 = vmatpush.msra.mxu0 0.0
          %433 = vmatpush.msra.mxu0 0.0
          %434 = vmatpush.msra.mxu0 0.0
          %435 = vmatpush.msra.mxu0 0.0
          %436 = vmatpush.msra.mxu0 0.0
          %437 = vmatpush.msra.mxu0 0.0
          %438 = vmatpush.msra.mxu0 0.0
          %439 = vmatpush.msra.mxu0 0.0
          %440 = vmatpush.msra.mxu0 0.0
          %441 = vmatpush.msra.mxu0 %v405
          %442 = vmatmul.f32.gmra.mxu0 %v275
          %v443 = vpop.f32.mrf.mxu0
          %v444 = vadd.f32 0.0, %v443
          %445 = vdwg.mxu0
          %v446 = vsub.f32 %v424, %v444
          %v447 = vadd.f32 %v317, 0.0
          %v448 = vadd.f32 %v360, 0.0
          %v449 = vadd.f32 %v403, 0.0
          %v450 = vadd.f32 %v446, 0.0
          %v451 = vld [vmem:[#allocation3 + $0x1] sm:$0x1]
          %v452 = vadd.f32 %v451, %v447
          %453 = vst [vmem:[#allocation3 + $0x1] sm:$0x1] %v452
          %v454 = vld [vmem:[#allocation3 + $0x2] sm:$0x1]
          %v455 = vadd.f32 %v454, %v448
          %456 = vst [vmem:[#allocation3 + $0x2] sm:$0x1] %v455
          %v457 = vld [vmem:[#allocation3 + $0x3] sm:$0x1]
          %v458 = vadd.f32 %v457, %v449
          %459 = vst [vmem:[#allocation3 + $0x3] sm:$0x1] %v458
          %v460 = vld [vmem:[#allocation3 + $0x4] sm:$0x1]
          %v461 = vadd.f32 %v460, %v450
          %462 = vst [vmem:[#allocation3 + $0x4] sm:$0x1] %v461
          // Predicated region
          $region53: #{tpu_custom_call.1} parent=47 // pred_check
            %p463 = pneg %p256
          $region54: #{tpu_custom_call.1} parent=47 // pred_check_branch
            %465 = sbr.rel (%p463) target = $region56
          $region55: #{tpu_custom_call.1} parent=47 // pred_region
            %v466 = vsub.f32 %v262, %v264
            %v467 = vmul.f32 %v466, %v466
            %v468 = vld [vmem:[#allocation3 + $0x1] sm:$0x1]
            %v469 = vmul.f32 %v468, 0.125
            %v470 = vmul.f32 %v469, %v469
            %v471 = vld [vmem:[#allocation3 + $0x2] sm:$0x1]
            %v472 = vmul.f32 %v471, 0.125
            %v473 = vmul.f32 %v472, %v472
            %v474 = vld [vmem:[#allocation3 + $0x3] sm:$0x1]
            %v475 = vmul.f32 %v474, 0.125
            %v476 = vmul.f32 %v475, %v475
            %v477 = vld [vmem:[#allocation3 + $0x4] sm:$0x1]
            %v478 = vmul.f32 %v477, 0.125
            %v479 = vmul.f32 %v478, %v478
            %v481 = vrot.slane %v470, 7
            %v484 = vrot.slane %v473, 6
            %v487 = vrot.slane %v476, 5
            %v490 = vrot.slane %v479, 4
            %vm492 = vcmask 1040384
            %v493 = vsel %vm492, %v467, %v481
            %vm494 = vcmask 1041408
            %v495 = vsel %vm494, %v493, %v484
            %vm496 = vcmask 1042432
            %v497 = vsel %vm496, %v495, %v487
            %vm498 = vcmask 1043456
            %v499 = vsel %vm498, %v497, %v490
            %500 = vst [vmem:[%s190] sm:$0x1f] %v499
          $region56: #{tpu_custom_call.1} parent=47 // pred_fallthru
            _
        $region48: #{tpu_custom_call.1} parent=27 // pred_fallthru
          _
        %p501 = scmp.lt.s32.totalorder %s20, 0
        %s502 = scalar_select %p501, %s20, 0
        %s503 = smul.addr %s502, 8
        %s504 = scalar_lea.vmem %s2, %s503
        // Predicated region
        $region57: #{tpu_custom_call.1} parent=27 // pred_check
          %p505 = pneg %p108
        $region58: #{tpu_custom_call.1} parent=27 // pred_check_branch
          %507 = sbr.rel (%p505) target = $region60
        $region59: #{tpu_custom_call.1} parent=27 // pred_region
          _
        $region60: #{tpu_custom_call.1} parent=27 // pred_fallthru
          _
        // Predicated region
        $region61: #{tpu_custom_call.1} parent=27 // pred_check
          %p508 = pneg %p108
        $region62: #{tpu_custom_call.1} parent=27 // pred_check_branch
          %510 = sbr.rel (%p508) target = $region64
        $region63: #{tpu_custom_call.1} parent=27 // pred_region
          %p511 = scmp.lt.s32.totalorder %s20, 0
          %s512 = scalar_select %p511, %s20, 0
          %s513 = smul.addr %s512, 8
          %s514 = scalar_lea.vmem %s2, %s513
        $region64: #{tpu_custom_call.1} parent=27 // pred_fallthru
          _
      $region28: #{tpu_custom_call.1} parent=5 // pred_fallthru
        _
      %p515 = scmp.le.s32.totalorder 2, %s10
      // Predicated region
      $region65: #{tpu_custom_call.1} parent=5 // pred_check
        %p516 = pneg %p515
      $region66: #{tpu_custom_call.1} parent=5 // pred_check_branch
        %518 = sbr.rel (%p516) target = $region68
      $region67: #{tpu_custom_call.1} parent=5 // pred_region
        %s519 = ssub.s32 %s10, 2
      $region68: #{tpu_custom_call.1} parent=5 // pred_fallthru
        _
    $region6: #{tpu_custom_call.1} parent=1 // loop_footer
      %s14 = sadd.s32 1, %s10
    $region7: #{tpu_custom_call.1} parent=1 // loop_footer_branch
      %9 = sbr.rel target = $region3
    $region8: #{tpu_custom_call.1} parent=1 // loop_exit
      _
    %520 = vsyncpa [#allocation5], 1
    %s521 = scalar_lea.sflag [#allocation5], 1
    %522 = vsyncpa %s521, 1
    %523 = vsyncpa [#allocation7], 1

</llo_original>
